<compile_context>
chip_gen: v5e
topology: v5e:2x2
jax: 0.10.0
libtpu: 0.0.40
codegen_flags: <defaults>
</compile_context>

<pallas_src>
import jax
import jax.numpy as jnp
from jax.experimental import pallas as pl
from jax.experimental.pallas import tpu as pltpu

LANE = 128      # TPU lane width (hidden dims padded to this for clean MXU tiles)
SUBLANE_BF16 = 16


def _round_up(n, m):
    return (n + m - 1) // m * m


def mlp_kernel(x_ref, w1_ref, b1_ref, w2_ref, b2_ref, w3_ref, b3_ref, o_ref):
    """One batch tile: sigmoid(relu(relu(x@W1+b1)@W2+b2) . w3 + b3).

    Layers 1-2 run on the MXU in bf16 with f32 accumulation; the final layer
    (single real output column) is a full-f32 VPU multiply + lane reduce, so
    no padded output columns are computed, stored, or pushed to HBM.
    """
    mxu_dtype = w1_ref.dtype

    x = x_ref[...]                                              # (tb, in_p) f32
    h1 = jnp.dot(x.astype(mxu_dtype), w1_ref[...],
                 preferred_element_type=jnp.float32)            # (tb, h1_p)
    h1 = jnp.maximum(h1 + b1_ref[...], 0.0)

    h2 = jnp.dot(h1.astype(mxu_dtype), w2_ref[...],
                 preferred_element_type=jnp.float32)            # (tb, h2_p)
    h2 = jnp.maximum(h2 + b2_ref[...], 0.0)

    # Final layer: w3 is a (1, h2_p) f32 row whose padded lanes are 0, and
    # h2's padded lanes are 0 after ReLU, so the lane reduction is exact.
    logits = jnp.sum(h2 * w3_ref[...], axis=-1, keepdims=True)  # (tb, 1) f32
    o_ref[...] = jax.nn.sigmoid(logits + b3_ref[...])


def neural_network_forward(x, padded_params, *, block_batch=2048):
    """x: (batch, input_size) f32. padded_params: output of pad_and_cast_params."""
    w1, b1 = padded_params["w1"], padded_params["b1"]
    w2, b2 = padded_params["w2"], padded_params["b2"]
    w3, b3 = padded_params["w3"], padded_params["b3"]

    batch, input_size = x.shape
    in_p = w1.shape[0]
    h1_p = w1.shape[1]
    h2_p = w2.shape[1]
    assert input_size <= in_p

    # ---- batch tiling -------------------------------------------------------
    # Cap the tile at block_batch, keep >= 2 "parallel" tiles whenever the
    # batch allows it (v7x has 2 TensorCores), and round the tile to the 8-row
    # sublane so batch-tail padding is at most 8*num_tiles rows.
    if batch > block_batch:
        num_tiles = pl.cdiv(batch, block_batch)
    elif batch >= 16:
        num_tiles = 2
    else:
        num_tiles = 1
    tb = _round_up(pl.cdiv(batch, num_tiles), 8)
    padded_batch = tb * num_tiles

    pad_rows = padded_batch - batch
    pad_cols = in_p - input_size
    x_p = jnp.pad(x, ((0, pad_rows), (0, pad_cols))) if (pad_rows or pad_cols) else x

    weight_bytes = sum(int(a.size) * a.dtype.itemsize
                       for a in (w1, b1, w2, b2, w3, b3))
    cost = pl.CostEstimate(
        flops=int(2 * padded_batch * (in_p * h1_p + h1_p * h2_p + h2_p * 1)),
        transcendentals=int(padded_batch),                 # sigmoid, real column only
        bytes_accessed=int(x_p.size * x_p.dtype.itemsize   # streamed input
                           + weight_bytes                  # resident weights (once)
                           + padded_batch * 4),            # 1-column f32 output
    )

    def resident(a):  # weights/biases: same block every grid step -> stay in VMEM
        return pl.BlockSpec(a.shape, lambda i: (0,) * a.ndim)

    out = pl.pallas_call(
        mlp_kernel,
        out_shape=jax.ShapeDtypeStruct((padded_batch, 1), jnp.float32),
        grid=(num_tiles,),
        in_specs=[
            pl.BlockSpec((tb, in_p), lambda i: (i, 0)),   # streamed batch tile
            resident(w1), resident(b1),
            resident(w2), resident(b2),
            resident(w3), resident(b3),
        ],
        out_specs=pl.BlockSpec((tb, 1), lambda i: (i, 0)),
        compiler_params=pltpu.CompilerParams(
            dimension_semantics=("parallel",),
            vmem_limit_bytes=32 * 1024 * 1024,   # fits on v7x's 64 MiB/TC too
        ),
        cost_estimate=cost,
    )(x_p, w1, b1, w2, b2, w3, b3)

    return out[:batch]


def init_params(key, input_size, n1, n2):
    """Logical-shape params mirroring nn.Linear (weights stored transposed)."""
    ks = jax.random.split(key, 6)

    def lin(kw, kb, fan_in, fan_out):
        bound = 1.0 / jnp.sqrt(fan_in)
        w = jax.random.uniform(kw, (fan_in, fan_out), jnp.float32, -bound, bound)
        b = jax.random.uniform(kb, (1, fan_out), jnp.float32, -bound, bound)
        return w, b

    w1, b1 = lin(ks[0], ks[1], input_size, n1)
    w2, b2 = lin(ks[2], ks[3], n1, n2)
    w3, b3 = lin(ks[4], ks[5], n2, 1)
    return {"w1": w1, "b1": b1, "w2": w2, "b2": b2, "w3": w3, "b3": b3}


def pad_and_cast_params(params, mxu_dtype=jnp.bfloat16):
    """Pad hidden dims to the 128-lane width, fan-in only to the bf16 sublane
    (16), and cast the MXU weights to bf16.  Padded weight entries and biases
    are exactly 0, so ReLU keeps padded lanes at 0 through all layers.  The
    final layer stays f32 and is stored as a (1, h2_p) row."""
    # TODO(synk): bf16 MXU weights are not bit-exact vs. PyTorch f32 nn.Linear;
    # pass mxu_dtype=jnp.float32 here if exact parity is required (free, the
    # kernel is HBM-bound and weights are ~100 KiB).
    def pad2(a, rows, cols, dtype):
        out = jnp.zeros((rows, cols), dtype)
        return out.at[: a.shape[0], : a.shape[1]].set(a.astype(dtype))

    in_p = _round_up(params["w1"].shape[0], SUBLANE_BF16)
    h1_p = _round_up(params["w1"].shape[1], LANE)
    h2_p = _round_up(params["w2"].shape[1], LANE)

    return {
        "w1": pad2(params["w1"], in_p, h1_p, mxu_dtype),
        "b1": pad2(params["b1"], 1, h1_p, jnp.float32),
        "w2": pad2(params["w2"], h1_p, h2_p, mxu_dtype),
        "b2": pad2(params["b2"], 1, h2_p, jnp.float32),
        "w3": pad2(params["w3"].T, 1, h2_p, jnp.float32),        # (1, h2_p) row
        "b3": params["b3"].astype(jnp.float32).reshape(1, 1),
    }


def reference_forward_matched(x, params, mxu_dtype=jnp.bfloat16):
    """Pure-JAX reference doing the same mixed-precision math as the kernel."""
    dt = mxu_dtype
    h1 = jnp.maximum(
        jnp.dot(x.astype(dt), params["w1"].astype(dt),
                preferred_element_type=jnp.float32) + params["b1"], 0.0)
    h2 = jnp.maximum(
        jnp.dot(h1.astype(dt), params["w2"].astype(dt),
                preferred_element_type=jnp.float32) + params["b2"], 0.0)
    logits = jnp.sum(h2 * params["w3"].reshape(1, -1), axis=-1, keepdims=True)
    return jax.nn.sigmoid(logits + params["b3"])


def reference_forward_f32(x, params):
    """Exact nn.Linear (f32) semantics."""
    h1 = jnp.maximum(x @ params["w1"] + params["b1"], 0.0)
    h2 = jnp.maximum(h1 @ params["w2"] + params["b2"], 0.0)
    return jax.nn.sigmoid(h2 @ params["w3"] + params["b3"])


if __name__ == "__main__":
    key = jax.random.PRNGKey(0)
    k_x, k_p, k_x2 = jax.random.split(key, 3)

    input_size = 16
    num_neurons_layer1, num_neurons_layer2 = 10, 10  # slider defaults

    params = init_params(k_p, input_size, num_neurons_layer1, num_neurons_layer2)
    padded_params = pad_and_cast_params(params, mxu_dtype=jnp.bfloat16)

    # Small-batch path (single tile, no padding at all).
    batch = 8
    x = jax.random.normal(k_x, (batch, input_size), jnp.float32)
    out = jax.block_until_ready(neural_network_forward(x, padded_params))
    assert out.shape == (batch, 1)

    ref = reference_forward_matched(x, params)
    assert jnp.allclose(out, ref, atol=1e-4, rtol=1e-4), \
        float(jnp.max(jnp.abs(out - ref)))
    ref32 = reference_forward_f32(x, params)
    assert jnp.allclose(out, ref32, atol=1e-2), \
        float(jnp.max(jnp.abs(out - ref32)))

    # Multi-tile path with a non-divisible batch (exercises 2 parallel tiles
    # and the 8-row batch-tail pad).
    batch2 = 300
    x2 = jax.random.normal(k_x2, (batch2, input_size), jnp.float32)
    out2 = jax.block_until_ready(neural_network_forward(x2, padded_params))
    assert out2.shape == (batch2, 1)
    ref2 = reference_forward_matched(x2, params)
    assert jnp.allclose(out2, ref2, atol=1e-4, rtol=1e-4), \
        float(jnp.max(jnp.abs(out2 - ref2)))

    print("KERNEL_OK")
</pallas_src>

<mosaic_0001>
module attributes {stable_mosaic.version = 11 : i64} {
  func.func @mlp_kernel(%arg0: i32, %arg1: memref<8x16xf32, #tpu.memory_space<vmem>>, %arg2: memref<16x128xbf16, #tpu.memory_space<vmem>>, %arg3: memref<1x128xf32, #tpu.memory_space<vmem>>, %arg4: memref<128x128xbf16, #tpu.memory_space<vmem>>, %arg5: memref<1x128xf32, #tpu.memory_space<vmem>>, %arg6: memref<1x128xf32, #tpu.memory_space<vmem>>, %arg7: memref<1x1xf32, #tpu.memory_space<vmem>>, %arg8: memref<8x1xf32, #tpu.memory_space<vmem>>) attributes {dimension_semantics = [#tpu.dimension_semantics<parallel>], iteration_bounds = array<i64: 1>, scalar_prefetch = 0 : i64, scratch_operands = 0 : i64, tpu.core_type = #tpu.core_type<tc>, window_params = [{transform_indices = @transform_0, window_bounds = array<i64: 8, 16>}, {pipeline_mode = #tpu.pipeline_mode<synchronous>, transform_indices = @transform_1, window_bounds = array<i64: 16, 128>}, {pipeline_mode = #tpu.pipeline_mode<synchronous>, transform_indices = @transform_2, window_bounds = array<i64: 1, 128>}, {pipeline_mode = #tpu.pipeline_mode<synchronous>, transform_indices = @transform_3, window_bounds = array<i64: 128, 128>}, {pipeline_mode = #tpu.pipeline_mode<synchronous>, transform_indices = @transform_4, window_bounds = array<i64: 1, 128>}, {pipeline_mode = #tpu.pipeline_mode<synchronous>, transform_indices = @transform_5, window_bounds = array<i64: 1, 128>}, {pipeline_mode = #tpu.pipeline_mode<synchronous>, transform_indices = @transform_6, window_bounds = array<i64: 1, 1>}, {transform_indices = @transform_7, window_bounds = array<i64: 8, 1>}]} {
    %c0 = arith.constant 0 : index
    %c0_0 = arith.constant 0 : index
    %0 = vector.load %arg1[%c0, %c0_0] : memref<8x16xf32, #tpu.memory_space<vmem>>, vector<8x16xf32>
    %1 = arith.truncf %0 : vector<8x16xf32> to vector<8x16xbf16>
    %c0_1 = arith.constant 0 : index
    %c0_2 = arith.constant 0 : index
    %2 = vector.load %arg2[%c0_1, %c0_2] : memref<16x128xbf16, #tpu.memory_space<vmem>>, vector<16x128xbf16>
    %cst = arith.constant dense<0.000000e+00> : vector<8x128xf32>
    %3 = tpu.matmul %1, %2, %cst {dimension_numbers = #tpu.dot_dimension_numbers<[1], [0], [0], [1], [0, 0, 1, 1], [], []>} : vector<8x16xbf16>, vector<16x128xbf16>, vector<8x128xf32> -> vector<8x128xf32>
    %c0_3 = arith.constant 0 : index
    %c0_4 = arith.constant 0 : index
    %4 = vector.load %arg3[%c0_3, %c0_4] : memref<1x128xf32, #tpu.memory_space<vmem>>, vector<1x128xf32>
    %5 = vector.broadcast %4 : vector<1x128xf32> to vector<8x128xf32>
    %6 = arith.addf %3, %5 : vector<8x128xf32>
    %cst_5 = arith.constant 0.000000e+00 : f32
    %7 = vector.broadcast %cst_5 : f32 to vector<8x128xf32>
    %8 = arith.maximumf %6, %7 : vector<8x128xf32>
    %9 = arith.truncf %8 : vector<8x128xf32> to vector<8x128xbf16>
    %c0_6 = arith.constant 0 : index
    %c0_7 = arith.constant 0 : index
    %10 = vector.load %arg4[%c0_6, %c0_7] : memref<128x128xbf16, #tpu.memory_space<vmem>>, vector<128x128xbf16>
    %cst_8 = arith.constant dense<0.000000e+00> : vector<8x128xf32>
    %11 = tpu.matmul %9, %10, %cst_8 {dimension_numbers = #tpu.dot_dimension_numbers<[1], [0], [0], [1], [0, 0, 1, 1], [], []>} : vector<8x128xbf16>, vector<128x128xbf16>, vector<8x128xf32> -> vector<8x128xf32>
    %c0_9 = arith.constant 0 : index
    %c0_10 = arith.constant 0 : index
    %12 = vector.load %arg5[%c0_9, %c0_10] : memref<1x128xf32, #tpu.memory_space<vmem>>, vector<1x128xf32>
    %13 = vector.broadcast %12 : vector<1x128xf32> to vector<8x128xf32>
    %14 = arith.addf %11, %13 : vector<8x128xf32>
    %cst_11 = arith.constant 0.000000e+00 : f32
    %15 = vector.broadcast %cst_11 : f32 to vector<8x128xf32>
    %16 = arith.maximumf %14, %15 : vector<8x128xf32>
    %c0_12 = arith.constant 0 : index
    %c0_13 = arith.constant 0 : index
    %17 = vector.load %arg6[%c0_12, %c0_13] : memref<1x128xf32, #tpu.memory_space<vmem>>, vector<1x128xf32>
    %18 = vector.broadcast %17 : vector<1x128xf32> to vector<8x128xf32>
    %19 = arith.mulf %16, %18 : vector<8x128xf32>
    %cst_14 = arith.constant dense<0.000000e+00> : vector<8xf32>
    %20 = vector.multi_reduction <add>, %19, %cst_14 [1] : vector<8x128xf32> to vector<8xf32>
    %21 = vector.shape_cast %20 : vector<8xf32> to vector<8x1xf32>
    %c0_15 = arith.constant 0 : index
    %c0_16 = arith.constant 0 : index
    %22 = vector.load %arg7[%c0_15, %c0_16] : memref<1x1xf32, #tpu.memory_space<vmem>>, vector<1x1xf32>
    %23 = vector.broadcast %22 : vector<1x1xf32> to vector<8x1xf32>
    %24 = arith.addf %21, %23 : vector<8x1xf32>
    %25 = arith.negf %24 : vector<8x1xf32>
    %26 = math.exp %25 : vector<8x1xf32>
    %cst_17 = arith.constant 1.000000e+00 : f32
    %27 = vector.broadcast %cst_17 : f32 to vector<8x1xf32>
    %28 = arith.addf %27, %26 : vector<8x1xf32>
    %29 = arith.divf %27, %28 : vector<8x1xf32>
    %c0_18 = arith.constant 0 : index
    %c0_19 = arith.constant 0 : index
    %30 = vector.load %arg8[%c0_18, %c0_19] : memref<8x1xf32, #tpu.memory_space<vmem>>, vector<8x1xf32>
    tpu.vector_store %arg8[%c0_18, %c0_19], %29 {strides = array<i32>} : memref<8x1xf32, #tpu.memory_space<vmem>>, vector<8x1xf32>,
    return
  }
  func.func @transform_0(%arg0: i32) -> (i32, i32) {
    %c0_i32 = arith.constant 0 : i32
    %c0_i32_0 = arith.constant 0 : i32
    return %arg0, %c0_i32 : i32, i32
  }
  func.func @transform_1(%arg0: i32) -> (i32, i32) {
    %c0_i32 = arith.constant 0 : i32
    %c0_i32_0 = arith.constant 0 : i32
    %c0_i32_1 = arith.constant 0 : i32
    return %c0_i32, %c0_i32_0 : i32, i32
  }
  func.func @transform_2(%arg0: i32) -> (i32, i32) {
    %c0_i32 = arith.constant 0 : i32
    %c0_i32_0 = arith.constant 0 : i32
    %c0_i32_1 = arith.constant 0 : i32
    return %c0_i32, %c0_i32_0 : i32, i32
  }
  func.func @transform_3(%arg0: i32) -> (i32, i32) {
    %c0_i32 = arith.constant 0 : i32
    %c0_i32_0 = arith.constant 0 : i32
    %c0_i32_1 = arith.constant 0 : i32
    return %c0_i32, %c0_i32_0 : i32, i32
  }
  func.func @transform_4(%arg0: i32) -> (i32, i32) {
    %c0_i32 = arith.constant 0 : i32
    %c0_i32_0 = arith.constant 0 : i32
    %c0_i32_1 = arith.constant 0 : i32
    return %c0_i32, %c0_i32_0 : i32, i32
  }
  func.func @transform_5(%arg0: i32) -> (i32, i32) {
    %c0_i32 = arith.constant 0 : i32
    %c0_i32_0 = arith.constant 0 : i32
    %c0_i32_1 = arith.constant 0 : i32
    return %c0_i32, %c0_i32_0 : i32, i32
  }
  func.func @transform_6(%arg0: i32) -> (i32, i32) {
    %c0_i32 = arith.constant 0 : i32
    %c0_i32_0 = arith.constant 0 : i32
    %c0_i32_1 = arith.constant 0 : i32
    return %c0_i32, %c0_i32_0 : i32, i32
  }
  func.func @transform_7(%arg0: i32) -> (i32, i32) {
    %c0_i32 = arith.constant 0 : i32
    %c0_i32_0 = arith.constant 0 : i32
    return %arg0, %c0_i32 : i32, i32
  }
}

</mosaic_0001>

<llo_original>
// kernel: tpu_custom_call.1
$region0: #{tpu_custom_call.1}
  #allocation0 [shape = 'u32[]', space=smem, size = 0x4, offset = 0x4, fixed_abs, tag = 'smem constant byte address 0x4 - core index']
  #allocation1 [shape = 'u32[72,128]{1,0:T(1,128)}', space=vmem, size = 0x9000, scoped, tag = 'internal scratch']
  #allocation2 [shape = 'f32[1,1]{1,0:T(1,128)S(1)}', space=vmem, size = 0x200, scoped, tag = 'scoped memory for tpu_custom_call.1']
  %s0 = inlined_call_operand.hbm [shape: f32[8,16], index: 0, kind: input, shape index: {}]
  %s1 = inlined_call_operand.hbm [shape: bf16[16,128], index: 1, kind: input, shape index: {}]
  %s2 = inlined_call_operand.vmem [shape: f32[1,128], index: 2, kind: input, shape index: {}]
  %s3 = inlined_call_operand.hbm [shape: bf16[128,128], index: 3, kind: input, shape index: {}]
  %s4 = inlined_call_operand.vmem [shape: f32[1,128], index: 4, kind: input, shape index: {}]
  %s5 = inlined_call_operand.vmem [shape: f32[1,128], index: 5, kind: input, shape index: {}]
  %s6 = inlined_call_operand.<no memory space> [shape: f32[1,1], index: 6, kind: input, shape index: {}]
  %s7 = inlined_call_operand.vmem [shape: f32[8,1], index: 7, kind: output, shape index: {}]
  %s8 = sld [smem:[#allocation0]]
  $region50: #{tpu_custom_call.1} parent=0
    _
  %s10 = ssub.s32 1, %s8
  %s11 = scalar_select 0, %s10, %s8
  %v12 = vstv %s6
  %13 = vst [vmem:[#allocation2] sm:$0x1] %v12
  $region1: #{tpu_custom_call.1} parent=0
    #allocation3 [shape = 'u8[4096]{0}', space=vmem, size = 0x1000, scoped, tag = 'input window, operand 0, single buffered']
    #allocation4 [shape = 's32[1]{0}', space=sflag, size = 0x4, scoped, tag = 'scoped memory for tpu_custom_call.1']
    #allocation5 [shape = 'u8[4096]{0}', space=vmem, size = 0x1000, scoped, tag = 'input window, operand 1, single buffered']
    #allocation6 [shape = 's32[1]{0}', space=sflag, size = 0x4, scoped, tag = 'scoped memory for tpu_custom_call.1']
    #allocation7 [shape = 'u8[32768]{0}', space=vmem, size = 0x8000, scoped, tag = 'input window, operand 3, single buffered']
    %14 = vsyncpa [#allocation4], 0
    %15 = vsyncpa [#allocation6], 0
    // Predicated region
    $region2: #{tpu_custom_call.1} parent=1 // pred_check
      _
    $region3: #{tpu_custom_call.1} parent=1 // pred_check_branch
      %17 = sbr.rel (0) target = $region5
    $region4: #{tpu_custom_call.1} parent=1 // pred_region
      %19 = vsyncadd [#allocation4], 0
      %s21 = sshll.u32 %s0, 4
      %s22 = int_to_ptr.hbm [resolvable:$true] %s21
      %s23 = sshll.u32 [#allocation3], 4
      %s24 = int_to_ptr.vmem [resolvable:$true] %s23
      %26 = dma.hbm_to_vmem [thread:$0]  %s22, 128, %s24, [#allocation4]
    $region5: #{tpu_custom_call.1} parent=1 // pred_fallthru
      _
    // Predicated region
    $region6: #{tpu_custom_call.1} parent=1 // pred_check
      _
    $region7: #{tpu_custom_call.1} parent=1 // pred_check_branch
      %28 = sbr.rel (0) target = $region9
    $region8: #{tpu_custom_call.1} parent=1 // pred_region
      %30 = vsyncadd [#allocation6], 0
      %s31 = sshll.u32 %s1, 4
      %s32 = int_to_ptr.hbm [resolvable:$true] %s31
      %s33 = sshll.u32 [#allocation5], 4
      %s34 = int_to_ptr.vmem [resolvable:$true] %s33
      %39 = dma.hbm_to_vmem [thread:$0]  %s32, 128, %s34, [#allocation6], 64, 64, 4
    $region9: #{tpu_custom_call.1} parent=1 // pred_fallthru
      _
    // Predicated region
    $region10: #{tpu_custom_call.1} parent=1 // pred_check
      _
    $region11: #{tpu_custom_call.1} parent=1 // pred_check_branch
      %41 = sbr.rel (0) target = $region13
    $region12: #{tpu_custom_call.1} parent=1 // pred_region
      _
    $region13: #{tpu_custom_call.1} parent=1 // pred_fallthru
      _
    // Predicated region
    $region14: #{tpu_custom_call.1} parent=1 // pred_check
      _
    $region15: #{tpu_custom_call.1} parent=1 // pred_check_branch
      %43 = sbr.rel (0) target = $region17
    $region16: #{tpu_custom_call.1} parent=1 // pred_region
      %45 = vsyncadd [#allocation6], 0
      %s46 = sshll.u32 %s3, 4
      %s47 = int_to_ptr.hbm [resolvable:$true] %s46
      %s48 = sshll.u32 [#allocation7], 4
      %s49 = int_to_ptr.vmem [resolvable:$true] %s48
      %54 = dma.hbm_to_vmem [thread:$0]  %s47, 1024, %s49, [#allocation6], 64, 64, 4
    $region17: #{tpu_custom_call.1} parent=1 // pred_fallthru
      _
    // Predicated region
    $region18: #{tpu_custom_call.1} parent=1 // pred_check
      _
    $region19: #{tpu_custom_call.1} parent=1 // pred_check_branch
      %56 = sbr.rel (0) target = $region21
    $region20: #{tpu_custom_call.1} parent=1 // pred_region
      _
    $region21: #{tpu_custom_call.1} parent=1 // pred_fallthru
      _
    // Predicated region
    $region22: #{tpu_custom_call.1} parent=1 // pred_check
      _
    $region23: #{tpu_custom_call.1} parent=1 // pred_check_branch
      %58 = sbr.rel (0) target = $region25
    $region24: #{tpu_custom_call.1} parent=1 // pred_region
      _
    $region25: #{tpu_custom_call.1} parent=1 // pred_fallthru
      _
    // Predicated region
    $region26: #{tpu_custom_call.1} parent=1 // pred_check
      _
    $region27: #{tpu_custom_call.1} parent=1 // pred_check_branch
      %60 = sbr.rel (0) target = $region29
    $region28: #{tpu_custom_call.1} parent=1 // pred_region
      _
    $region29: #{tpu_custom_call.1} parent=1 // pred_fallthru
      _
    // Predicated region
    $region30: #{tpu_custom_call.1} parent=1 // pred_check
      _
    $region31: #{tpu_custom_call.1} parent=1 // pred_check_branch
      %62 = sbr.rel (0) target = $region33
    $region32: #{tpu_custom_call.1} parent=1 // pred_region
      %64 = dma.done [#allocation4], 128
    $region33: #{tpu_custom_call.1} parent=1 // pred_fallthru
      _
    // Predicated region
    $region34: #{tpu_custom_call.1} parent=1 // pred_check
      _
    $region35: #{tpu_custom_call.1} parent=1 // pred_check_branch
      %66 = sbr.rel (0) target = $region37
    $region36: #{tpu_custom_call.1} parent=1 // pred_region
      %68 = dma.done [#allocation6], 128
    $region37: #{tpu_custom_call.1} parent=1 // pred_fallthru
      _
    // Predicated region
    $region38: #{tpu_custom_call.1} parent=1 // pred_check
      _
    $region39: #{tpu_custom_call.1} parent=1 // pred_check_branch
      %70 = sbr.rel (0) target = $region41
    $region40: #{tpu_custom_call.1} parent=1 // pred_region
      %72 = dma.done [#allocation6], 1024
    $region41: #{tpu_custom_call.1} parent=1 // pred_fallthru
      _
    %v74 = vld [vmem:[#allocation3] sm:$0xff]
    %v75 = vpack.c.bf16 %v74, %v74
    %v76 = vld [vmem:[#allocation5] sm:$0xf]
    %v77 = vld [vmem:[#allocation5 + $0x4] sm:$0xf]
    %v78 = vld [vmem:[%s2] sm:$0x1]
    %v80 = vperm.slane %v78, 0
    %v84 = vunpack.c.l.b16 %v76
    %v85 = vunpack.c.l.b16 %v77
    %v86 = vpack.c.b16 %v85, %v84
    %vm88 = vcmask 130048
    %v90 = vsel %vm88, %v75, 0
    %92 = vmatpush.bf16.msra.mxu0 0
    %93 = vmatpush.bf16.msra.mxu0 0
    %94 = vmatpush.bf16.msra.mxu0 0
    %95 = vmatpush.bf16.msra.mxu0 0
    %96 = vmatpush.bf16.msra.mxu0 0
    %97 = vmatpush.bf16.msra.mxu0 0
    %98 = vmatpush.bf16.msra.mxu0 0
    %99 = vmatpush.bf16.msra.mxu0 %v86
    %100 = vmatmul.bf16.gmra.mxu0 %v90
    %v101 = vpop.f32.mrf.mxu0
    %v102 = vadd.f32 %v80, %v101
    %v103 = vpop.f32.mrf.mxu0
    %104 = vdwg.mxu0
    %v105 = vmax.f32 %v102, 0.0
    %v106 = vpack.c.bf16 %v105, %v105
    %v107 = vld [vmem:[#allocation7] sm:$0xf]
    %v108 = vld [vmem:[#allocation7 + $0x4] sm:$0xf]
    %v109 = vld [vmem:[#allocation7 + $0x8] sm:$0xf]
    %v110 = vld [vmem:[#allocation7 + $0xc] sm:$0xf]
    %v111 = vld [vmem:[#allocation7 + $0x10] sm:$0xf]
    %v112 = vld [vmem:[#allocation7 + $0x14] sm:$0xf]
    %v113 = vld [vmem:[#allocation7 + $0x18] sm:$0xf]
    %v114 = vld [vmem:[#allocation7 + $0x1c] sm:$0xf]
    %v115 = vld [vmem:[#allocation7 + $0x20] sm:$0xf]
    %v116 = vld [vmem:[#allocation7 + $0x24] sm:$0xf]
    %v117 = vld [vmem:[#allocation7 + $0x28] sm:$0xf]
    %v118 = vld [vmem:[#allocation7 + $0x2c] sm:$0xf]
    %v119 = vld [vmem:[#allocation7 + $0x30] sm:$0xf]
    %v120 = vld [vmem:[#allocation7 + $0x34] sm:$0xf]
    %v121 = vld [vmem:[#allocation7 + $0x38] sm:$0xf]
    %v122 = vld [vmem:[#allocation7 + $0x3c] sm:$0xf]
    %v123 = vld [vmem:[%s4] sm:$0x1]
    %v125 = vperm.slane %v123, 0
    %v143 = vunpack.c.l.b16 %v107
    %v144 = vunpack.c.l.b16 %v108
    %v145 = vunpack.c.l.b16 %v109
    %v146 = vunpack.c.l.b16 %v110
    %v147 = vunpack.c.l.b16 %v111
    %v148 = vunpack.c.l.b16 %v112
    %v149 = vunpack.c.l.b16 %v113
    %v150 = vunpack.c.l.b16 %v114
    %v151 = vunpack.c.l.b16 %v115
    %v152 = vunpack.c.l.b16 %v116
    %v153 = vunpack.c.l.b16 %v117
    %v154 = vunpack.c.l.b16 %v118
    %v155 = vunpack.c.l.b16 %v119
    %v156 = vunpack.c.l.b16 %v120
    %v157 = vunpack.c.l.b16 %v121
    %v158 = vunpack.c.l.b16 %v122
    %v159 = vpack.c.b16 %v144, %v143
    %v160 = vpack.c.b16 %v146, %v145
    %v161 = vpack.c.b16 %v148, %v147
    %v162 = vpack.c.b16 %v150, %v149
    %v163 = vpack.c.b16 %v152, %v151
    %v164 = vpack.c.b16 %v154, %v153
    %v165 = vpack.c.b16 %v156, %v155
    %v166 = vpack.c.b16 %v158, %v157
    %175 = vmatpush.bf16.msra.mxu0 %v166
    %176 = vmatpush.bf16.msra.mxu0 %v165
    %177 = vmatpush.bf16.msra.mxu0 %v164
    %178 = vmatpush.bf16.msra.mxu0 %v163
    %179 = vmatpush.bf16.msra.mxu0 %v162
    %180 = vmatpush.bf16.msra.mxu0 %v161
    %181 = vmatpush.bf16.msra.mxu0 %v160
    %182 = vmatpush.bf16.msra.mxu0 %v159
    %183 = vmatmul.bf16.gmra.mxu0 %v106
    %v184 = vpop.f32.mrf.mxu0
    %v185 = vadd.f32 %v125, %v184
    %v186 = vpop.f32.mrf.mxu0
    %187 = vdwg.mxu0
    %v188 = vmax.f32 %v185, 0.0
    %v189 = vld [vmem:[%s5] sm:$0x1]
    %v191 = vperm.slane %v189, 0
    %v193 = vmul.f32 %v188, %v191
    %194 = vadd.xlane.f32.xlu0 %v193
    %v195 = vpop.xlane.xlu0 %194
    %v196 = vld [vmem:[#allocation2] sm:$0x1]
    %v198 = vperm.slane %v196, 0
    %v200 = vadd.f32 %v195, %v198
    %v201 = vxor.u32 %v200, 2147483648
    %v202 = vmul.f32 %v201, 1.442695
    %v203 = vpow.pop %v202
    %v204 = vadd.f32 %v203, 1.0
    %v205 = vrcp.pop %v204
    %v206 = vmul.f32 %v204, %v205
    %v207 = vsub.f32 1.0, %v206
    %v208 = vmul.f32 %v205, %v207
    %v209 = vadd.f32 %v205, %v208
    %vm210 = vweird.f32 %v204
    %vm211 = vweird.f32 %v205
    %vm212 = vmor %vm210, %vm211
    %v213 = vsel %vm212, %v205, %v209
    %v214 = vand.u32 2147483647, %v204
    %vm215 = vcmp.eq.f32.partialorder %v214, 8.507059e+37
    %v216 = vand.u32 %v204, 2147483648
    %v217 = vor.u32 1.1754944e-38, %v216
    %v218 = vsel %vm215, %v217, %v213
    %v219 = vmul.f32 1.0, %v218
    %vm220 = vcmask 7168
    %221 = vst.msk [vmem:[%s7] sm:$0xff] %vm220, %v219
    // Predicated region
    $region42: #{tpu_custom_call.1} parent=1 // pred_check
      _
    $region43: #{tpu_custom_call.1} parent=1 // pred_check_branch
      %223 = sbr.rel (0) target = $region45
    $region44: #{tpu_custom_call.1} parent=1 // pred_region
      _
    $region45: #{tpu_custom_call.1} parent=1 // pred_fallthru
      _
    // Predicated region
    $region46: #{tpu_custom_call.1} parent=1 // pred_check
      _
    $region47: #{tpu_custom_call.1} parent=1 // pred_check_branch
      %225 = sbr.rel (0) target = $region49
    $region48: #{tpu_custom_call.1} parent=1 // pred_region
      _
    $region49: #{tpu_custom_call.1} parent=1 // pred_fallthru
      _
    %226 = vsyncpa [#allocation4], 1
    %227 = vsyncpa [#allocation6], 1

</llo_original>
